<compile_context>
chip_gen: v6e
topology: v6e:2x2x1
jax: 0.10.0
libtpu: 0.0.40
codegen_flags: <defaults>
</compile_context>

<pallas_src>
import functools

import numpy as np
import jax
import jax.numpy as jnp
from jax.experimental import pallas as pl
from jax.experimental.pallas import tpu as pltpu


_MAX_BLOCK_E = 4096                      # upper cap on rows per weight tile
_BLOCK_E_VMEM_BUDGET = 12 * 1024 * 1024  # bytes: weight dbuf + one-hot temps
_VMEM_LIMIT_BYTES = 32 * 1024 * 1024     # safe on v5e/v6e (128 MiB) & v7x (64 MiB)


def _ceil_to(x, m):
    return (x + m - 1) // m * m


def _pick_block_e(num_rows, emb_dim, n_idx):
    """Largest row tile such that the double-buffered f32 weight tile plus the
    per-step (N, block_e) one-hot intermediates stay inside the VMEM budget."""
    per_row = 2 * emb_dim * 4 + n_idx * 6   # 2x f32 weight rows + i32 iota + bf16 one-hot
    cap = max(128, (_BLOCK_E_VMEM_BUDGET // per_row) // 128 * 128)
    cap = min(cap, _MAX_BLOCK_E)
    if num_rows <= cap:
        return num_rows                      # single tile (block == full row extent)
    if num_rows % 128 != 0:
        raise ValueError(
            "num_emb must be a multiple of 128 for tiled weight streaming "
            f"(got {num_rows}); pad the tables (MergedEmbCatDense does this).")
    be = cap
    while num_rows % be != 0:
        be -= 128
    return be


def _merged_embbag_kernel(idx_ref, bag_ref, w_ref, out_ref, acc_ref, seg_ref,
                          *, block_e):
    # idx_ref: (1, N, 1) i32       -- flat indices of table t, as a column
    # bag_ref: (1, 1, N) i32       -- bag id per index (-1 == pad slot)
    # w_ref  : (1, block_e, D) f32 -- E-tile of table t's weights
    # out_ref: (1, B, D) f32       -- per-table output block (resident across e)
    # acc_ref: (B, D) f32 scratch  -- accumulator over the E tiles
    # seg_ref: (B, N) bf16 scratch -- per-table bag one-hot (hoisted at e == 0)
    e = pl.program_id(1)
    n_e = pl.num_programs(1)

    b = acc_ref.shape[0]
    n = bag_ref.shape[-1]

    # New table -> reset accumulator and (re)build the bag one-hot once.
    @pl.when(e == 0)
    def _():
        acc_ref[...] = jnp.zeros_like(acc_ref)
        bag = bag_ref[0]                                       # (1, N)
        seg_ref[...] = (
            jax.lax.broadcasted_iota(jnp.int32, (b, n), 0) == bag
        ).astype(jnp.bfloat16)                                 # pad slots (bag=-1) -> 0

    idx_col = idx_ref[0]                                       # (N, 1) i32
    w = w_ref[0]                                               # (block_e, D) f32

    # row_oh[i, r] = 1 iff flat index i selects row (e*block_e + r) of this table.
    # Built directly in (N, block_e) orientation -> both matmuls contract
    # LHS-last / RHS-first (no relayout of the big one-hot); bf16 is exact for
    # 0/1 values and halves the MXU passes of the counts matmul.
    row_oh = (
        jax.lax.broadcasted_iota(jnp.int32, (n, block_e), 1) + e * block_e
        == idx_col
    ).astype(jnp.bfloat16)

    # counts[b, r] = number of times bag b pulls row r of this weight tile.
    counts = jnp.dot(seg_ref[...], row_oh, preferred_element_type=jnp.float32)
    # Weights stay f32 (bit-comparable to the f32 reference).
    acc_ref[...] += jnp.dot(counts, w, preferred_element_type=jnp.float32)

    # Finalize table t.
    @pl.when(e == n_e - 1)
    def _():
        out_ref[0] = acc_ref[...].astype(out_ref.dtype)


def merged_embbag_cat_forward(idx_pad, bag_pad, weights, dense):
    """idx_pad/bag_pad: (T, N) i32 (N a multiple of 128; pad slots bag == -1),
    weights: (T, E, D) f32, dense: (B, D_dense) f32
    -> (B, D_dense + T*D) f32 == cat([dense, embbag_0, ..., embbag_{T-1}], 1)."""
    T, E, D = weights.shape
    B = dense.shape[0]
    N = idx_pad.shape[-1]

    block_e = _pick_block_e(E, D, N)
    n_e = E // block_e

    kernel = functools.partial(_merged_embbag_kernel, block_e=block_e)

    emb = pl.pallas_call(
        kernel,
        out_shape=jax.ShapeDtypeStruct((T, B, D), jnp.float32),
        grid=(T, n_e),
        in_specs=[
            pl.BlockSpec((1, N, 1), lambda t, e: (t, 0, 0)),         # idx (column)
            pl.BlockSpec((1, 1, N), lambda t, e: (t, 0, 0)),         # bag (lane-major)
            pl.BlockSpec((1, block_e, D), lambda t, e: (t, e, 0)),   # weight E-tile
        ],
        out_specs=pl.BlockSpec((1, B, D), lambda t, e: (t, 0, 0)),   # per-table block
        scratch_shapes=[pltpu.VMEM((B, D), jnp.float32),
                        pltpu.VMEM((B, N), jnp.bfloat16)],
        compiler_params=pltpu.CompilerParams(
            dimension_semantics=("parallel", "arbitrary"),
            vmem_limit_bytes=_VMEM_LIMIT_BYTES),
    )(
        idx_pad.reshape(T, N, 1).astype(jnp.int32),
        bag_pad.reshape(T, 1, N).astype(jnp.int32),
        weights,
    )

    # Assemble the "cat" outside the kernel (tiny copy); keeping the output
    # split per table is what lets the T grid axis run in parallel on v7x.
    emb_flat = jnp.transpose(emb, (1, 0, 2)).reshape(B, T * D)
    return jnp.concatenate([dense, emb_flat], axis=1)


def _pad_and_bagify(indices_list, offsets_list, batch):
    """Pad ragged per-table indices to a common lane-dense length N (multiple of
    128) and expand offsets into per-index bag ids (pad slots get bag id -1)."""
    T = len(indices_list)
    max_len = max(int(len(i)) for i in indices_list)
    n_pad = max(128, int(np.ceil(max_len / 128.0) * 128))
    idx_pad = np.zeros((T, n_pad), np.int32)
    bag_pad = np.full((T, n_pad), -1, np.int32)
    for t in range(T):
        ind = np.asarray(indices_list[t], dtype=np.int64)
        off = np.asarray(offsets_list[t], dtype=np.int64)
        n = ind.shape[0]
        per_bag = np.diff(np.concatenate([off, [n]]))
        idx_pad[t, :n] = ind
        bag_pad[t, :n] = np.repeat(np.arange(batch, dtype=np.int32), per_bag)
    return jnp.asarray(idx_pad), jnp.asarray(bag_pad)


class MergedEmbCatDense:
    """JAX/Pallas equivalent of the PyTorch module (sum-mode EmbeddingBags + cat)."""

    def __init__(self, num_tables, num_emb, emb_dim, key):
        # deterministic synthetic weights (EmbeddingBag default dtype = f32)
        w = 0.01 * jax.random.normal(
            key, (num_tables, num_emb, emb_dim), jnp.float32)
        # Pad tables row-wise so the kernel can always use a large VMEM-sized
        # row tile (replaces the old block_e = E fallback for awkward E).
        e_pad = num_emb if num_emb <= _MAX_BLOCK_E else _ceil_to(num_emb, 1024)
        if e_pad != num_emb:
            w = jnp.pad(w, ((0, 0), (0, e_pad - num_emb), (0, 0)))
        self.weights = w
        self.num_emb = num_emb
        self._fwd = jax.jit(merged_embbag_cat_forward)

    def __call__(self, indices_list, offsets_list, dense):
        B = dense.shape[0]
        idx_pad, bag_pad = _pad_and_bagify(indices_list, offsets_list, B)
        return self._fwd(idx_pad, bag_pad, self.weights, dense)


def _ref_forward(indices_list, offsets_list, dense, weights):
    """NumPy reference: torch.nn.EmbeddingBag(mode='sum') per table + cat."""
    B = dense.shape[0]
    outs = [np.asarray(dense)]
    for t in range(weights.shape[0]):
        ind = np.asarray(indices_list[t])
        off = np.asarray(offsets_list[t])
        w = np.asarray(weights[t])
        o = np.zeros((B, w.shape[1]), np.float32)
        ends = list(off[1:]) + [len(ind)]
        for b in range(B):
            sel = ind[off[b]:ends[b]]
            if len(sel):
                o[b] = w[sel].sum(0)
        outs.append(o)
    return np.concatenate(outs, axis=1)


if __name__ == "__main__":
    T, E, D = 4, 512, 128        # num tables, rows per table, embedding dim
    B, D_DENSE = 8, 128          # batch, dense feature width

    key = jax.random.PRNGKey(0)
    k_counts, k_idx, k_dense, k_w = jax.random.split(key, 4)

    # per-table ragged indices / offsets (pooling factor 1..7 per bag)
    counts = np.asarray(jax.random.randint(k_counts, (T, B), 1, 8))
    ikeys = jax.random.split(k_idx, T)
    indices_list, offsets_list = [], []
    for t in range(T):
        off = np.concatenate([[0], np.cumsum(counts[t])[:-1]]).astype(np.int64)
        n = int(counts[t].sum())
        ind = np.asarray(jax.random.randint(ikeys[t], (n,), 0, E)).astype(np.int64)
        indices_list.append(ind)
        offsets_list.append(off)

    dense = jax.random.normal(k_dense, (B, D_DENSE), jnp.float32)

    model = MergedEmbCatDense(T, E, D, k_w)
    out = model(indices_list, offsets_list, dense)
    out = jax.block_until_ready(out)

    ref = _ref_forward(indices_list, offsets_list, np.asarray(dense),
                       np.asarray(model.weights))
    np.testing.assert_allclose(np.asarray(out), ref, rtol=1e-5, atol=1e-5)
    assert out.shape == (B, D_DENSE + T * D)
    print("KERNEL_OK")
</pallas_src>

<mosaic_0001>
module attributes {stable_mosaic.version = 11 : i64} {
  func.func @_merged_embbag_kernel(%arg0: i32, %arg1: i32, %arg2: memref<1x128x1xi32, #tpu.memory_space<vmem>>, %arg3: memref<1x1x128xi32, #tpu.memory_space<vmem>>, %arg4: memref<1x512x128xf32, #tpu.memory_space<vmem>>, %arg5: memref<1x8x128xf32, #tpu.memory_space<vmem>>, %arg6: memref<8x128xf32, #tpu.memory_space<vmem>>, %arg7: memref<8x128xbf16, #tpu.memory_space<vmem>>) attributes {dimension_semantics = [#tpu.dimension_semantics<parallel>, #tpu.dimension_semantics<arbitrary>], iteration_bounds = array<i64: 4, 1>, scalar_prefetch = 0 : i64, scratch_operands = 2 : i64, tpu.core_type = #tpu.core_type<tc>, window_params = [{transform_indices = @transform_0, window_bounds = array<i64: 1, 128, 1>}, {transform_indices = @transform_1, window_bounds = array<i64: 1, 1, 128>}, {transform_indices = @transform_2, window_bounds = array<i64: 1, 512, 128>}, {transform_indices = @transform_3, window_bounds = array<i64: 1, 8, 128>}]} {
    %c0_i32 = arith.constant 0 : i32
    %0 = arith.cmpi eq, %arg1, %c0_i32 : i32
    %1 = arith.extui %0 : i1 to i32
    %c0_i32_0 = arith.constant 0 : i32
    %2 = arith.cmpi ne, %1, %c0_i32_0 : i32
    scf.if %2 {
      %cst_15 = arith.constant 0.000000e+00 : f32
      %25 = vector.broadcast %cst_15 : f32 to vector<8x128xf32>
      %c0_16 = arith.constant 0 : index
      %c0_17 = arith.constant 0 : index
      %26 = vector.load %arg6[%c0_16, %c0_17] : memref<8x128xf32, #tpu.memory_space<vmem>>, vector<8x128xf32>
      tpu.vector_store %arg6[%c0_16, %c0_17], %25 {strides = array<i32>} : memref<8x128xf32, #tpu.memory_space<vmem>>, vector<8x128xf32>,
      %c0_18 = arith.constant 0 : index
      %c0_19 = arith.constant 0 : index
      %c0_20 = arith.constant 0 : index
      %27 = vector.load %arg3[%c0_18, %c0_19, %c0_20] : memref<1x1x128xi32, #tpu.memory_space<vmem>>, vector<1x1x128xi32>
      %28 = vector.shape_cast %27 : vector<1x1x128xi32> to vector<1x128xi32>
      %29 = tpu.iota {dimensions = array<i32: 0>} : vector<8x128xi32>
      %30 = vector.broadcast %28 : vector<1x128xi32> to vector<8x128xi32>
      %31 = arith.cmpi eq, %29, %30 : vector<8x128xi32>
      %32 = arith.extui %31 : vector<8x128xi1> to vector<8x128xi32>
      %33 = arith.sitofp %32 : vector<8x128xi32> to vector<8x128xf32>
      %34 = arith.truncf %33 : vector<8x128xf32> to vector<8x128xbf16>
      %c0_21 = arith.constant 0 : index
      %c0_22 = arith.constant 0 : index
      %35 = vector.load %arg7[%c0_21, %c0_22] : memref<8x128xbf16, #tpu.memory_space<vmem>>, vector<8x128xbf16>
      tpu.vector_store %arg7[%c0_21, %c0_22], %34 {strides = array<i32>} : memref<8x128xbf16, #tpu.memory_space<vmem>>, vector<8x128xbf16>,
    } else {
    }
    %c0 = arith.constant 0 : index
    %c0_1 = arith.constant 0 : index
    %c0_2 = arith.constant 0 : index
    %3 = vector.load %arg2[%c0, %c0_1, %c0_2] : memref<1x128x1xi32, #tpu.memory_space<vmem>>, vector<1x128x1xi32>
    %4 = vector.shape_cast %3 : vector<1x128x1xi32> to vector<128x1xi32>
    %c0_3 = arith.constant 0 : index
    %c0_4 = arith.constant 0 : index
    %c0_5 = arith.constant 0 : index
    %5 = vector.load %arg4[%c0_3, %c0_4, %c0_5] : memref<1x512x128xf32, #tpu.memory_space<vmem>>, vector<1x512x128xf32>
    %6 = vector.shape_cast %5 : vector<1x512x128xf32> to vector<512x128xf32>
    %7 = tpu.iota {dimensions = array<i32: 1>} : vector<128x512xi32>
    %c512_i32 = arith.constant 512 : i32
    %8 = arith.muli %arg1, %c512_i32 : i32
    %9 = vector.broadcast %8 : i32 to vector<128x512xi32>
    %10 = arith.addi %7, %9 : vector<128x512xi32>
    %11 = vector.broadcast %4 : vector<128x1xi32> to vector<128x512xi32>
    %12 = arith.cmpi eq, %10, %11 : vector<128x512xi32>
    %13 = arith.extui %12 : vector<128x512xi1> to vector<128x512xi32>
    %14 = arith.sitofp %13 : vector<128x512xi32> to vector<128x512xf32>
    %15 = arith.truncf %14 : vector<128x512xf32> to vector<128x512xbf16>
    %c0_6 = arith.constant 0 : index
    %c0_7 = arith.constant 0 : index
    %16 = vector.load %arg7[%c0_6, %c0_7] : memref<8x128xbf16, #tpu.memory_space<vmem>>, vector<8x128xbf16>
    %cst = arith.constant dense<0.000000e+00> : vector<8x512xf32>
    %17 = tpu.matmul %16, %15, %cst {dimension_numbers = #tpu.dot_dimension_numbers<[1], [0], [0], [1], [0, 0, 1, 1], [], []>} : vector<8x128xbf16>, vector<128x512xbf16>, vector<8x512xf32> -> vector<8x512xf32>
    %c0_8 = arith.constant 0 : index
    %c0_9 = arith.constant 0 : index
    %18 = vector.load %arg6[%c0_8, %c0_9] : memref<8x128xf32, #tpu.memory_space<vmem>>, vector<8x128xf32>
    %cst_10 = arith.constant dense<0.000000e+00> : vector<8x128xf32>
    %19 = tpu.matmul %17, %6, %cst_10 {dimension_numbers = #tpu.dot_dimension_numbers<[1], [0], [0], [1], [0, 0, 1, 1], [], []>} : vector<8x512xf32>, vector<512x128xf32>, vector<8x128xf32> -> vector<8x128xf32>
    %20 = arith.addf %18, %19 : vector<8x128xf32>
    %c0_11 = arith.constant 0 : index
    %c0_12 = arith.constant 0 : index
    %21 = vector.load %arg6[%c0_11, %c0_12] : memref<8x128xf32, #tpu.memory_space<vmem>>, vector<8x128xf32>
    tpu.vector_store %arg6[%c0_11, %c0_12], %20 {strides = array<i32>} : memref<8x128xf32, #tpu.memory_space<vmem>>, vector<8x128xf32>,
    %c0_i32_13 = arith.constant 0 : i32
    %22 = arith.cmpi eq, %arg1, %c0_i32_13 : i32
    %23 = arith.extui %22 : i1 to i32
    %c0_i32_14 = arith.constant 0 : i32
    %24 = arith.cmpi ne, %23, %c0_i32_14 : i32
    scf.if %24 {
      %c0_15 = arith.constant 0 : index
      %c0_16 = arith.constant 0 : index
      %25 = vector.load %arg6[%c0_15, %c0_16] : memref<8x128xf32, #tpu.memory_space<vmem>>, vector<8x128xf32>
      %c0_17 = arith.constant 0 : index
      %c0_18 = arith.constant 0 : index
      %c0_19 = arith.constant 0 : index
      %26 = vector.load %arg5[%c0_17, %c0_18, %c0_19] : memref<1x8x128xf32, #tpu.memory_space<vmem>>, vector<1x8x128xf32>
      %27 = vector.shape_cast %26 : vector<1x8x128xf32> to vector<8x128xf32>
      %28 = vector.shape_cast %25 : vector<8x128xf32> to vector<1x8x128xf32>
      tpu.vector_store %arg5[%c0_17, %c0_18, %c0_19], %28 {strides = array<i32>} : memref<1x8x128xf32, #tpu.memory_space<vmem>>, vector<1x8x128xf32>,
    } else {
    }
    return
  }
  func.func @transform_0(%arg0: i32, %arg1: i32) -> (i32, i32, i32) {
    %c0_i32 = arith.constant 0 : i32
    %c0_i32_0 = arith.constant 0 : i32
    %c0_i32_1 = arith.constant 0 : i32
    return %arg0, %c0_i32, %c0_i32_0 : i32, i32, i32
  }
  func.func @transform_1(%arg0: i32, %arg1: i32) -> (i32, i32, i32) {
    %c0_i32 = arith.constant 0 : i32
    %c0_i32_0 = arith.constant 0 : i32
    %c0_i32_1 = arith.constant 0 : i32
    return %arg0, %c0_i32, %c0_i32_0 : i32, i32, i32
  }
  func.func @transform_2(%arg0: i32, %arg1: i32) -> (i32, i32, i32) {
    %c0_i32 = arith.constant 0 : i32
    %c0_i32_0 = arith.constant 0 : i32
    return %arg0, %arg1, %c0_i32 : i32, i32, i32
  }
  func.func @transform_3(%arg0: i32, %arg1: i32) -> (i32, i32, i32) {
    %c0_i32 = arith.constant 0 : i32
    %c0_i32_0 = arith.constant 0 : i32
    %c0_i32_1 = arith.constant 0 : i32
    return %arg0, %c0_i32, %c0_i32_0 : i32, i32, i32
  }
}

</mosaic_0001>

<llo_original>
// kernel: merged_embbag_cat_forward.1
$region0: #{merged_embbag_cat_forward.1}
  #allocation0 [shape = 'u32[]', space=smem, size = 0x4, offset = 0x4, fixed_abs, tag = 'smem constant byte address 0x4 - core index']
  #allocation1 [shape = 'u32[144,128]{1,0:T(1,128)}', space=vmem, size = 0x12000, scoped, tag = 'internal scratch']
  #allocation2 [shape = 'f32[8,128]{1,0:T(8,128)}', space=vmem, size = 0x1000, scoped, tag = 'scratch operand']
  #allocation3 [shape = 'bf16[8,128]{1,0:T(8,128)(2,1)}', space=vmem, size = 0x800, scoped, tag = 'scratch operand']
  %s0 = inlined_call_operand.vmem [shape: s32[4,128,1], index: 0, kind: input, shape index: {}]
  %s1 = inlined_call_operand.vmem [shape: s32[4,1,128], index: 1, kind: input, shape index: {}]
  %s2 = inlined_call_operand.hbm [shape: f32[4,512,128], index: 2, kind: input, shape index: {}]
  %s3 = inlined_call_operand.vmem [shape: f32[4,8,128], index: 3, kind: output, shape index: {}]
  %s4 = sld [smem:[#allocation0]]
  $region57: #{merged_embbag_cat_forward.1} parent=0
    _
  %s6 = ssub.s32 1, %s4
  %s7 = scalar_select 0, %s6, %s4
  $region1: #{merged_embbag_cat_forward.1} parent=0
    #allocation4 [shape = 'u8[524288]{0}', space=vmem, size = 0x80000, scoped, tag = 'input window, operand 2']
    #allocation5 [shape = 's32[2]{0}', space=sflag, size = 0x8, scoped, tag = 'scoped memory for merged_embbag_cat_forward.1']
    %8 = vsyncpa [#allocation5], 0
    %s9 = scalar_lea.sflag [#allocation5], 1
    %10 = vsyncpa %s9, 0
    loop: start=0, step=1, limit=6
    $region2: #{merged_embbag_cat_forward.1} parent=1 // loop_pre_header
      _
    $region3: #{merged_embbag_cat_forward.1} parent=1 // loop_header
      %s12 = sphi 0, %s16
      %p13 = scmp.ge.s32.totalorder %s12, 6
      %s19 = sphi 0, %s31
      %s20 = sphi 0, %s27
      %s21 = sphi 0, %s19
      %s22 = sphi 0, %s20
      %s23 = sphi 0, %s21
      %s24 = sphi 0, %s22
      %s34 = sphi 0, %s36
      %s37 = sphi 0, %s34
      %s38 = sphi 0, %s37
      %s54 = sphi 0, %s38
      %s60 = sphi 0, %s62
      %s63 = sphi 0, %s60
      %s64 = sphi 0, %s63
      %s80 = sphi 0, %s64
      %s88 = sphi 0, %s90
      %s91 = sphi 0, %s88
      %s92 = sphi 0, %s91
      %s108 = sphi 0, %s92
      %s114 = sphi 0, %s116
      %s117 = sphi 0, %s114
      %s118 = sphi 0, %s117
      %s134 = sphi 0, %s118
    $region4: #{merged_embbag_cat_forward.1} parent=1 // loop_header_branch
      %15 = sbr.rel (%p13) target = $region8
    $region5: #{merged_embbag_cat_forward.1} parent=1 // loop_body
      %s17 = ssub.s32 %s12, 1
      %s18 = ssub.s32 %s12, 2
      %s25 = sadd.s32 1, %s20
      %p26 = scmp.ge.s32.totalorder %s25, 1
      %s27 = scalar_select %p26, 0, %s25
      %s28 = sadd.s32 1, %s19
      %s29 = scalar_select %p26, %s28, %s19
      %p30 = scmp.ge.s32.totalorder %s29, 4
      %s31 = scalar_select %p30, 0, %s29
      %s32 = ssub.s32 %s19, %s31
      %p33 = scmp.eq.s32.totalorder %s32, 0
      %s35 = sadd.s32 %s34, 1
      %s36 = scalar_select %p33, %s34, %s35
      %p39 = pneg %p33
      %p40 = scmp.eq.s32.totalorder %s12, 3
      %p41 = por %p39, %p40
      %p42 = scmp.ne.s32.totalorder %s34, %s37
      %p43 = scmp.eq.s32.totalorder %s12, 0
      %p44 = por %p42, %p43
      %p45 = scmp.ne.s32.totalorder %s34, %s37
      %p46 = scmp.eq.s32.totalorder %s17, 3
      %p47 = por %p45, %p46
      %p48 = scmp.ne.s32.totalorder %s37, %s38
      %p49 = scmp.eq.s32.totalorder %s17, 0
      %p50 = por %p48, %p49
      %p51 = scmp.ne.s32.totalorder %s37, %s38
      %p52 = scmp.eq.s32.totalorder %s18, 3
      %p53 = por %p51, %p52
      %p55 = scmp.ne.s32.totalorder %s38, %s54
      %p56 = scmp.eq.s32.totalorder %s18, 0
      %p57 = por %p55, %p56
      %s58 = ssub.s32 %s19, %s31
      %p59 = scmp.eq.s32.totalorder %s58, 0
      %s61 = sadd.s32 %s60, 1
      %s62 = scalar_select %p59, %s60, %s61
      %p65 = pneg %p59
      %p66 = scmp.eq.s32.totalorder %s12, 3
      %p67 = por %p65, %p66
      %p68 = scmp.ne.s32.totalorder %s60, %s63
      %p69 = scmp.eq.s32.totalorder %s12, 0
      %p70 = por %p68, %p69
      %p71 = scmp.ne.s32.totalorder %s60, %s63
      %p72 = scmp.eq.s32.totalorder %s17, 3
      %p73 = por %p71, %p72
      %p74 = scmp.ne.s32.totalorder %s63, %s64
      %p75 = scmp.eq.s32.totalorder %s17, 0
      %p76 = por %p74, %p75
      %p77 = scmp.ne.s32.totalorder %s63, %s64
      %p78 = scmp.eq.s32.totalorder %s18, 3
      %p79 = por %p77, %p78
      %p81 = scmp.ne.s32.totalorder %s64, %s80
      %p82 = scmp.eq.s32.totalorder %s18, 0
      %p83 = por %p81, %p82
      %s84 = ssub.s32 %s19, %s31
      %s85 = ssub.s32 %s20, %s27
      %s86 = sor.u32 %s84, %s85
      %p87 = scmp.eq.s32.totalorder %s86, 0
      %s89 = sadd.s32 %s88, 1
      %s90 = scalar_select %p87, %s88, %s89
      %p93 = pneg %p87
      %p94 = scmp.eq.s32.totalorder %s12, 3
      %p95 = por %p93, %p94
      %p96 = scmp.ne.s32.totalorder %s88, %s91
      %p97 = scmp.eq.s32.totalorder %s12, 0
      %p98 = por %p96, %p97
      %p99 = scmp.ne.s32.totalorder %s88, %s91
      %p100 = scmp.eq.s32.totalorder %s17, 3
      %p101 = por %p99, %p100
      %p102 = scmp.ne.s32.totalorder %s91, %s92
      %p103 = scmp.eq.s32.totalorder %s17, 0
      %p104 = por %p102, %p103
      %p105 = scmp.ne.s32.totalorder %s91, %s92
      %p106 = scmp.eq.s32.totalorder %s18, 3
      %p107 = por %p105, %p106
      %p109 = scmp.ne.s32.totalorder %s92, %s108
      %p110 = scmp.eq.s32.totalorder %s18, 0
      %p111 = por %p109, %p110
      %s112 = ssub.s32 %s19, %s31
      %p113 = scmp.eq.s32.totalorder %s112, 0
      %s115 = sadd.s32 %s114, 1
      %s116 = scalar_select %p113, %s114, %s115
      %p119 = pneg %p113
      %p120 = scmp.eq.s32.totalorder %s12, 3
      %p121 = por %p119, %p120
      %p122 = scmp.ne.s32.totalorder %s114, %s117
      %p123 = scmp.eq.s32.totalorder %s12, 0
      %p124 = por %p122, %p123
      %p125 = scmp.ne.s32.totalorder %s114, %s117
      %p126 = scmp.eq.s32.totalorder %s17, 3
      %p127 = por %p125, %p126
      %p128 = scmp.ne.s32.totalorder %s117, %s118
      %p129 = scmp.eq.s32.totalorder %s17, 0
      %p130 = por %p128, %p129
      %p131 = scmp.ne.s32.totalorder %s117, %s118
      %p132 = scmp.eq.s32.totalorder %s18, 3
      %p133 = por %p131, %p132
      %p135 = scmp.ne.s32.totalorder %s118, %s134
      %p136 = scmp.eq.s32.totalorder %s18, 0
      %p137 = por %p135, %p136
      %p138 = scmp.le.s32.totalorder 1, %s12
      %p139 = scmp.lt.s32.totalorder %s12, 5
      %p140 = pnand %p138, %p139
      %p141 = pneg %p140
      // Predicated region
      $region9: #{merged_embbag_cat_forward.1} parent=5 // pred_check
        _
      $region10: #{merged_embbag_cat_forward.1} parent=5 // pred_check_branch
        %143 = sbr.rel (%p140) target = $region12
      $region11: #{merged_embbag_cat_forward.1} parent=5 // pred_region
        %s144 = ssub.s32 %s12, 1
      $region12: #{merged_embbag_cat_forward.1} parent=5 // pred_fallthru
        _
      %p145 = scmp.lt.s32.totalorder %s12, 4
      // Predicated region
      $region13: #{merged_embbag_cat_forward.1} parent=5 // pred_check
        %p146 = pneg %p145
      $region14: #{merged_embbag_cat_forward.1} parent=5 // pred_check_branch
        %148 = sbr.rel (%p146) target = $region16
      $region15: #{merged_embbag_cat_forward.1} parent=5 // pred_region
        // Predicated region
        $region17: #{merged_embbag_cat_forward.1} parent=15 // pred_check
          %p149 = pneg %p44
        $region18: #{merged_embbag_cat_forward.1} parent=15 // pred_check_branch
          %151 = sbr.rel (%p149) target = $region20
        $region19: #{merged_embbag_cat_forward.1} parent=15 // pred_region
          %p152 = scmp.lt.s32.totalorder %s19, 3
          %s153 = scalar_select %p152, %s19, 3
          %s154 = smul.addr %s153, 16
          %s155 = smul.addr %s154, 8
          %s156 = scalar_lea.vmem %s0, %s155
        $region20: #{merged_embbag_cat_forward.1} parent=15 // pred_fallthru
          _
        // Predicated region
        $region21: #{merged_embbag_cat_forward.1} parent=15 // pred_check
          %p157 = pneg %p70
        $region22: #{merged_embbag_cat_forward.1} parent=15 // pred_check_branch
          %159 = sbr.rel (%p157) target = $region24
        $region23: #{merged_embbag_cat_forward.1} parent=15 // pred_region
          %p160 = scmp.lt.s32.totalorder %s19, 3
          %s161 = scalar_select %p160, %s19, 3
          %s162 = scalar_lea.vmem %s1, %s161
        $region24: #{merged_embbag_cat_forward.1} parent=15 // pred_fallthru
          _
        // Predicated region
        $region25: #{merged_embbag_cat_forward.1} parent=15 // pred_check
          %p163 = pneg %p98
        $region26: #{merged_embbag_cat_forward.1} parent=15 // pred_check_branch
          %165 = sbr.rel (%p163) target = $region28
        $region27: #{merged_embbag_cat_forward.1} parent=15 // pred_region
          %s166 = sand.u32 %s88, 1
          %s167 = scalar_lea.sflag [#allocation5], %s166
          %s168 = sand.u32 %s88, 1
          %s169 = smul.addr %s168, 512
          %s170 = scalar_lea.vmem [#allocation4], %s169
          %s171 = smul.u32 64, %s20
          %s173 = ssub.s32 8192, 8192
          %174 = vsyncadd %s167, %s173
          %s175 = smul.addr %s19, 64
          %s176 = sadd.s32 %s171, %s175
          %s177 = smul.addr %s176, 128
          %s178 = scalar_lea.hbm %s2, %s177
          %s179 = sshll.u32 %s170, 4
          %s180 = int_to_ptr.vmem [resolvable:$true] %s179
          %185 = dma.hbm_to_vmem [thread:$0]  %s178, 8192, %s180, %s167, 128, 128, 8
        $region28: #{merged_embbag_cat_forward.1} parent=15 // pred_fallthru
          _
      $region16: #{merged_embbag_cat_forward.1} parent=5 // pred_fallthru
        _
      %p186 = scmp.le.s32.totalorder 1, %s12
      %p187 = scmp.lt.s32.totalorder %s12, 5
      %p188 = pnand %p186, %p187
      %p189 = pneg %p188
      // Predicated region
      $region29: #{merged_embbag_cat_forward.1} parent=5 // pred_check
        _
      $region30: #{merged_embbag_cat_forward.1} parent=5 // pred_check_branch
        %191 = sbr.rel (%p188) target = $region32
      $region31: #{merged_embbag_cat_forward.1} parent=5 // pred_region
        %s192 = ssub.s32 %s12, 1
        %s193 = sand.u32 %s91, 1
        %s194 = scalar_lea.sflag [#allocation5], %s193
        %s195 = sand.u32 %s91, 1
        %s196 = smul.addr %s195, 512
        %s197 = scalar_lea.vmem [#allocation4], %s196
        // Predicated region
        $region33: #{merged_embbag_cat_forward.1} parent=31 // pred_check
          %p198 = pneg %p104
        $region34: #{merged_embbag_cat_forward.1} parent=31 // pred_check_branch
          %200 = sbr.rel (%p198) target = $region36
        $region35: #{merged_embbag_cat_forward.1} parent=31 // pred_region
          %201 = dma.done %s194, 8192
        $region36: #{merged_embbag_cat_forward.1} parent=31 // pred_fallthru
          _
        %p202 = scmp.lt.s32.totalorder %s21, 3
        %s203 = scalar_select %p202, %s21, 3
        %s204 = smul.addr %s203, 16
        %s205 = smul.addr %s204, 8
        %s206 = scalar_lea.vmem %s0, %s205
        %p207 = pneg %p50
        %p208 = pneg %p47
        %p209 = scmp.lt.s32.totalorder %s21, 3
        %s210 = scalar_select %p209, %s21, 3
        %s211 = scalar_lea.vmem %s1, %s210
        %p212 = pneg %p76
        %p213 = pneg %p73
        %s214 = sand.u32 %s91, 1
        %s215 = scalar_lea.sflag [#allocation5], %s214
        %s216 = sand.u32 %s91, 1
        %s217 = smul.addr %s216, 512
        %s218 = scalar_lea.vmem [#allocation4], %s217
        %p219 = pneg %p104
        %p220 = pneg %p101
        %p221 = pneg %p130
        %p222 = pneg %p127
        %p223 = scmp.lt.s32.totalorder %s21, 3
        %s224 = scalar_select %p223, %s21, 3
        %s225 = smul.addr %s224, 8
        %s226 = scalar_lea.vmem %s3, %s225
        %p227 = scmp.lt.s32.totalorder %s21, 3
        %s228 = scalar_select %p227, %s21, 3
        %s229 = smul.addr %s228, 16
        %s230 = smul.addr %s229, 8
        %s231 = scalar_lea.vmem %s0, %s230
        %p232 = scmp.lt.s32.totalorder %s21, 3
        %s233 = scalar_select %p232, %s21, 3
        %s234 = scalar_lea.vmem %s1, %s233
        %s235 = smul.u32 64, %s22
        %p236 = scmp.lt.s32.totalorder %s21, 3
        %s237 = scalar_select %p236, %s21, 3
        %s238 = smul.addr %s237, 8
        %s239 = scalar_lea.vmem %s3, %s238
        %p241 = scmp.eq.s32.totalorder %s22, 0
        // Predicated region
        $region37: #{merged_embbag_cat_forward.1} parent=31 // pred_check
          %p242 = pneg %p241
        $region38: #{merged_embbag_cat_forward.1} parent=31 // pred_check_branch
          %244 = sbr.rel (%p242) target = $region40
        $region39: #{merged_embbag_cat_forward.1} parent=31 // pred_region
          %245 = vst [vmem:[#allocation2] sm:$0xff] 0.0
          %v246 = vld [vmem:[%s234] sm:$0x1]
          %v247 = vlaneseq
          %v248 = vshrl.u32 %v247, 7
          %v249 = vlaneseq
          %v250 = vshrl.u32 %v249, 7
          %v251 = vsub.s32 0, %v250
          %v252 = vrot.slane %v246, %v251
          %vm253 = vcmp.eq.s32.totalorder %v248, %v252
          %v254 = vsel %vm253, 1, 0
          %v255 = vcvt.s32.f32 %v254
          %v256 = vpack.c.bf16 %v255, %v255
          %257 = vst [vmem:[#allocation3] sm:$0xf] %v256
        $region40: #{merged_embbag_cat_forward.1} parent=31 // pred_fallthru
          _
        %v258 = vld [vmem:[%s231] sm:$0xff]
        %v259 = vld [vmem:[%s231 + $0x8] sm:$0xff]
        %v260 = vld [vmem:[%s231 + $0x10] sm:$0xff]
        %v261 = vld [vmem:[%s231 + $0x18] sm:$0xff]
        %v262 = vld [vmem:[%s231 + $0x20] sm:$0xff]
        %v263 = vld [vmem:[%s231 + $0x28] sm:$0xff]
        %v264 = vld [vmem:[%s231 + $0x30] sm:$0xff]
        %v265 = vld [vmem:[%s231 + $0x38] sm:$0xff]
        %v266 = vld [vmem:[%s231 + $0x40] sm:$0xff]
        %v267 = vld [vmem:[%s231 + $0x48] sm:$0xff]
        %v268 = vld [vmem:[%s231 + $0x50] sm:$0xff]
        %v269 = vld [vmem:[%s231 + $0x58] sm:$0xff]
        %v270 = vld [vmem:[%s231 + $0x60] sm:$0xff]
        %v271 = vld [vmem:[%s231 + $0x68] sm:$0xff]
        %v272 = vld [vmem:[%s231 + $0x70] sm:$0xff]
        %v273 = vld [vmem:[%s231 + $0x78] sm:$0xff]
        %v274 = vld [vmem:[%s197] sm:$0xff]
        %v275 = vld [vmem:[%s197 + $0x8] sm:$0xff]
        %v276 = vld [vmem:[%s197 + $0x10] sm:$0xff]
        %v277 = vld [vmem:[%s197 + $0x18] sm:$0xff]
        %v278 = vld [vmem:[%s197 + $0x20] sm:$0xff]
        %v279 = vld [vmem:[%s197 + $0x28] sm:$0xff]
        %v280 = vld [vmem:[%s197 + $0x30] sm:$0xff]
        %v281 = vld [vmem:[%s197 + $0x38] sm:$0xff]
        %v282 = vld [vmem:[%s197 + $0x40] sm:$0xff]
        %v283 = vld [vmem:[%s197 + $0x48] sm:$0xff]
        %v284 = vld [vmem:[%s197 + $0x50] sm:$0xff]
        %v285 = vld [vmem:[%s197 + $0x58] sm:$0xff]
        %v286 = vld [vmem:[%s197 + $0x60] sm:$0xff]
        %v287 = vld [vmem:[%s197 + $0x68] sm:$0xff]
        %v288 = vld [vmem:[%s197 + $0x70] sm:$0xff]
        %v289 = vld [vmem:[%s197 + $0x78] sm:$0xff]
        %v290 = vld [vmem:[%s197 + $0x80] sm:$0xff]
        %v291 = vld [vmem:[%s197 + $0x88] sm:$0xff]
        %v292 = vld [vmem:[%s197 + $0x90] sm:$0xff]
        %v293 = vld [vmem:[%s197 + $0x98] sm:$0xff]
        %v294 = vld [vmem:[%s197 + $0xa0] sm:$0xff]
        %v295 = vld [vmem:[%s197 + $0xa8] sm:$0xff]
        %v296 = vld [vmem:[%s197 + $0xb0] sm:$0xff]
        %v297 = vld [vmem:[%s197 + $0xb8] sm:$0xff]
        %v298 = vld [vmem:[%s197 + $0xc0] sm:$0xff]
        %v299 = vld [vmem:[%s197 + $0xc8] sm:$0xff]
        %v300 = vld [vmem:[%s197 + $0xd0] sm:$0xff]
        %v301 = vld [vmem:[%s197 + $0xd8] sm:$0xff]
        %v302 = vld [vmem:[%s197 + $0xe0] sm:$0xff]
        %v303 = vld [vmem:[%s197 + $0xe8] sm:$0xff]
        %v304 = vld [vmem:[%s197 + $0xf0] sm:$0xff]
        %v305 = vld [vmem:[%s197 + $0xf8] sm:$0xff]
        %v306 = vld [vmem:[%s197 + $0x100] sm:$0xff]
        %v307 = vld [vmem:[%s197 + $0x108] sm:$0xff]
        %v308 = vld [vmem:[%s197 + $0x110] sm:$0xff]
        %v309 = vld [vmem:[%s197 + $0x118] sm:$0xff]
        %v310 = vld [vmem:[%s197 + $0x120] sm:$0xff]
        %v311 = vld [vmem:[%s197 + $0x128] sm:$0xff]
        %v312 = vld [vmem:[%s197 + $0x130] sm:$0xff]
        %v313 = vld [vmem:[%s197 + $0x138] sm:$0xff]
        %v314 = vld [vmem:[%s197 + $0x140] sm:$0xff]
        %v315 = vld [vmem:[%s197 + $0x148] sm:$0xff]
        %v316 = vld [vmem:[%s197 + $0x150] sm:$0xff]
        %v317 = vld [vmem:[%s197 + $0x158] sm:$0xff]
        %v318 = vld [vmem:[%s197 + $0x160] sm:$0xff]
        %v319 = vld [vmem:[%s197 + $0x168] sm:$0xff]
        %v320 = vld [vmem:[%s197 + $0x170] sm:$0xff]
        %v321 = vld [vmem:[%s197 + $0x178] sm:$0xff]
        %v322 = vld [vmem:[%s197 + $0x180] sm:$0xff]
        %v323 = vld [vmem:[%s197 + $0x188] sm:$0xff]
        %v324 = vld [vmem:[%s197 + $0x190] sm:$0xff]
        %v325 = vld [vmem:[%s197 + $0x198] sm:$0xff]
        %v326 = vld [vmem:[%s197 + $0x1a0] sm:$0xff]
        %v327 = vld [vmem:[%s197 + $0x1a8] sm:$0xff]
        %v328 = vld [vmem:[%s197 + $0x1b0] sm:$0xff]
        %v329 = vld [vmem:[%s197 + $0x1b8] sm:$0xff]
        %v330 = vld [vmem:[%s197 + $0x1c0] sm:$0xff]
        %v331 = vld [vmem:[%s197 + $0x1c8] sm:$0xff]
        %v332 = vld [vmem:[%s197 + $0x1d0] sm:$0xff]
        %v333 = vld [vmem:[%s197 + $0x1d8] sm:$0xff]
        %v334 = vld [vmem:[%s197 + $0x1e0] sm:$0xff]
        %v335 = vld [vmem:[%s197 + $0x1e8] sm:$0xff]
        %v336 = vld [vmem:[%s197 + $0x1f0] sm:$0xff]
        %v337 = vld [vmem:[%s197 + $0x1f8] sm:$0xff]
        %v338 = vlaneseq
        %v339 = vand.u32 %v338, 127
        %v340 = vadd.s32 %v339, 128
        %v341 = vadd.s32 %v339, 256
        %v342 = vadd.s32 %v339, 384
        %s343 = smul.u32 %s22, 512
        %v344 = vstv %s343
        %v345 = vadd.s32 %v339, %v344
        %v346 = vadd.s32 %v340, %v344
        %v347 = vadd.s32 %v341, %v344
        %v348 = vadd.s32 %v342, %v344
        %349 = vset.pattern.permute.xlu0 0
        %350 = vperm.xlu0 %349, %v258
        %v351 = vpop.permute.xlu0 %350
        %352 = vset.pattern.permute.xlu0 0
        %353 = vperm.xlu0 %352, %v259
        %v354 = vpop.permute.xlu0 %353
        %355 = vset.pattern.permute.xlu0 0
        %356 = vperm.xlu0 %355, %v260
        %v357 = vpop.permute.xlu0 %356
        %358 = vset.pattern.permute.xlu0 0
        %359 = vperm.xlu0 %358, %v261
        %v360 = vpop.permute.xlu0 %359
        %361 = vset.pattern.permute.xlu0 0
        %362 = vperm.xlu0 %361, %v262
        %v363 = vpop.permute.xlu0 %362
        %364 = vset.pattern.permute.xlu0 0
        %365 = vperm.xlu0 %364, %v263
        %v366 = vpop.permute.xlu0 %365
        %367 = vset.pattern.permute.xlu0 0
        %368 = vperm.xlu0 %367, %v264
        %v369 = vpop.permute.xlu0 %368
        %370 = vset.pattern.permute.xlu0 0
        %371 = vperm.xlu0 %370, %v265
        %v372 = vpop.permute.xlu0 %371
        %373 = vset.pattern.permute.xlu0 0
        %374 = vperm.xlu0 %373, %v266
        %v375 = vpop.permute.xlu0 %374
        %376 = vset.pattern.permute.xlu0 0
        %377 = vperm.xlu0 %376, %v267
        %v378 = vpop.permute.xlu0 %377
        %379 = vset.pattern.permute.xlu0 0
        %380 = vperm.xlu0 %379, %v268
        %v381 = vpop.permute.xlu0 %380
        %382 = vset.pattern.permute.xlu0 0
        %383 = vperm.xlu0 %382, %v269
        %v384 = vpop.permute.xlu0 %383
        %385 = vset.pattern.permute.xlu0 0
        %386 = vperm.xlu0 %385, %v270
        %v387 = vpop.permute.xlu0 %386
        %388 = vset.pattern.permute.xlu0 0
        %389 = vperm.xlu0 %388, %v271
        %v390 = vpop.permute.xlu0 %389
        %391 = vset.pattern.permute.xlu0 0
        %392 = vperm.xlu0 %391, %v272
        %v393 = vpop.permute.xlu0 %392
        %394 = vset.pattern.permute.xlu0 0
        %395 = vperm.xlu0 %394, %v273
        %v396 = vpop.permute.xlu0 %395
        %vm397 = vcmp.eq.s32.totalorder %v345, %v351
        %vm398 = vcmp.eq.s32.totalorder %v346, %v351
        %vm399 = vcmp.eq.s32.totalorder %v347, %v351
        %vm400 = vcmp.eq.s32.totalorder %v348, %v351
        %vm401 = vcmp.eq.s32.totalorder %v345, %v354
        %vm402 = vcmp.eq.s32.totalorder %v346, %v354
        %vm403 = vcmp.eq.s32.totalorder %v347, %v354
        %vm404 = vcmp.eq.s32.totalorder %v348, %v354
        %vm405 = vcmp.eq.s32.totalorder %v345, %v357
        %vm406 = vcmp.eq.s32.totalorder %v346, %v357
        %vm407 = vcmp.eq.s32.totalorder %v347, %v357
        %vm408 = vcmp.eq.s32.totalorder %v348, %v357
        %vm409 = vcmp.eq.s32.totalorder %v345, %v360
        %vm410 = vcmp.eq.s32.totalorder %v346, %v360
        %vm411 = vcmp.eq.s32.totalorder %v347, %v360
        %vm412 = vcmp.eq.s32.totalorder %v348, %v360
        %vm413 = vcmp.eq.s32.totalorder %v345, %v363
        %vm414 = vcmp.eq.s32.totalorder %v346, %v363
        %vm415 = vcmp.eq.s32.totalorder %v347, %v363
        %vm416 = vcmp.eq.s32.totalorder %v348, %v363
        %vm417 = vcmp.eq.s32.totalorder %v345, %v366
        %vm418 = vcmp.eq.s32.totalorder %v346, %v366
        %vm419 = vcmp.eq.s32.totalorder %v347, %v366
        %vm420 = vcmp.eq.s32.totalorder %v348, %v366
        %vm421 = vcmp.eq.s32.totalorder %v345, %v369
        %vm422 = vcmp.eq.s32.totalorder %v346, %v369
        %vm423 = vcmp.eq.s32.totalorder %v347, %v369
        %vm424 = vcmp.eq.s32.totalorder %v348, %v369
        %vm425 = vcmp.eq.s32.totalorder %v345, %v372
        %vm426 = vcmp.eq.s32.totalorder %v346, %v372
        %vm427 = vcmp.eq.s32.totalorder %v347, %v372
        %vm428 = vcmp.eq.s32.totalorder %v348, %v372
        %vm429 = vcmp.eq.s32.totalorder %v345, %v375
        %vm430 = vcmp.eq.s32.totalorder %v346, %v375
        %vm431 = vcmp.eq.s32.totalorder %v347, %v375
        %vm432 = vcmp.eq.s32.totalorder %v348, %v375
        %vm433 = vcmp.eq.s32.totalorder %v345, %v378
        %vm434 = vcmp.eq.s32.totalorder %v346, %v378
        %vm435 = vcmp.eq.s32.totalorder %v347, %v378
        %vm436 = vcmp.eq.s32.totalorder %v348, %v378
        %vm437 = vcmp.eq.s32.totalorder %v345, %v381
        %vm438 = vcmp.eq.s32.totalorder %v346, %v381
        %vm439 = vcmp.eq.s32.totalorder %v347, %v381
        %vm440 = vcmp.eq.s32.totalorder %v348, %v381
        %vm441 = vcmp.eq.s32.totalorder %v345, %v384
        %vm442 = vcmp.eq.s32.totalorder %v346, %v384
        %vm443 = vcmp.eq.s32.totalorder %v347, %v384
        %vm444 = vcmp.eq.s32.totalorder %v348, %v384
        %vm445 = vcmp.eq.s32.totalorder %v345, %v387
        %vm446 = vcmp.eq.s32.totalorder %v346, %v387
        %vm447 = vcmp.eq.s32.totalorder %v347, %v387
        %vm448 = vcmp.eq.s32.totalorder %v348, %v387
        %vm449 = vcmp.eq.s32.totalorder %v345, %v390
        %vm450 = vcmp.eq.s32.totalorder %v346, %v390
        %vm451 = vcmp.eq.s32.totalorder %v347, %v390
        %vm452 = vcmp.eq.s32.totalorder %v348, %v390
        %vm453 = vcmp.eq.s32.totalorder %v345, %v393
        %vm454 = vcmp.eq.s32.totalorder %v346, %v393
        %vm455 = vcmp.eq.s32.totalorder %v347, %v393
        %vm456 = vcmp.eq.s32.totalorder %v348, %v393
        %vm457 = vcmp.eq.s32.totalorder %v345, %v396
        %vm458 = vcmp.eq.s32.totalorder %v346, %v396
        %vm459 = vcmp.eq.s32.totalorder %v347, %v396
        %vm460 = vcmp.eq.s32.totalorder %v348, %v396
        %v461 = vsel %vm397, 1, 0
        %v462 = vsel %vm398, 1, 0
        %v463 = vsel %vm399, 1, 0
        %v464 = vsel %vm400, 1, 0
        %v465 = vsel %vm401, 1, 0
        %v466 = vsel %vm402, 1, 0
        %v467 = vsel %vm403, 1, 0
        %v468 = vsel %vm404, 1, 0
        %v469 = vsel %vm405, 1, 0
        %v470 = vsel %vm406, 1, 0
        %v471 = vsel %vm407, 1, 0
        %v472 = vsel %vm408, 1, 0
        %v473 = vsel %vm409, 1, 0
        %v474 = vsel %vm410, 1, 0
        %v475 = vsel %vm411, 1, 0
        %v476 = vsel %vm412, 1, 0
        %v477 = vsel %vm413, 1, 0
        %v478 = vsel %vm414, 1, 0
        %v479 = vsel %vm415, 1, 0
        %v480 = vsel %vm416, 1, 0
        %v481 = vsel %vm417, 1, 0
        %v482 = vsel %vm418, 1, 0
        %v483 = vsel %vm419, 1, 0
        %v484 = vsel %vm420, 1, 0
        %v485 = vsel %vm421, 1, 0
        %v486 = vsel %vm422, 1, 0
        %v487 = vsel %vm423, 1, 0
        %v488 = vsel %vm424, 1, 0
        %v489 = vsel %vm425, 1, 0
        %v490 = vsel %vm426, 1, 0
        %v491 = vsel %vm427, 1, 0
        %v492 = vsel %vm428, 1, 0
        %v493 = vsel %vm429, 1, 0
        %v494 = vsel %vm430, 1, 0
        %v495 = vsel %vm431, 1, 0
        %v496 = vsel %vm432, 1, 0
        %v497 = vsel %vm433, 1, 0
        %v498 = vsel %vm434, 1, 0
        %v499 = vsel %vm435, 1, 0
        %v500 = vsel %vm436, 1, 0
        %v501 = vsel %vm437, 1, 0
        %v502 = vsel %vm438, 1, 0
        %v503 = vsel %vm439, 1, 0
        %v504 = vsel %vm440, 1, 0
        %v505 = vsel %vm441, 1, 0
        %v506 = vsel %vm442, 1, 0
        %v507 = vsel %vm443, 1, 0
        %v508 = vsel %vm444, 1, 0
        %v509 = vsel %vm445, 1, 0
        %v510 = vsel %vm446, 1, 0
        %v511 = vsel %vm447, 1, 0
        %v512 = vsel %vm448, 1, 0
        %v513 = vsel %vm449, 1, 0
        %v514 = vsel %vm450, 1, 0
        %v515 = vsel %vm451, 1, 0
        %v516 = vsel %vm452, 1, 0
        %v517 = vsel %vm453, 1, 0
        %v518 = vsel %vm454, 1, 0
        %v519 = vsel %vm455, 1, 0
        %v520 = vsel %vm456, 1, 0
        %v521 = vsel %vm457, 1, 0
        %v522 = vsel %vm458, 1, 0
        %v523 = vsel %vm459, 1, 0
        %v524 = vsel %vm460, 1, 0
        %v525 = vcvt.s32.f32 %v461
        %v526 = vcvt.s32.f32 %v462
        %v527 = vcvt.s32.f32 %v463
        %v528 = vcvt.s32.f32 %v464
        %v529 = vcvt.s32.f32 %v465
        %v530 = vcvt.s32.f32 %v466
        %v531 = vcvt.s32.f32 %v467
        %v532 = vcvt.s32.f32 %v468
        %v533 = vcvt.s32.f32 %v469
        %v534 = vcvt.s32.f32 %v470
        %v535 = vcvt.s32.f32 %v471
        %v536 = vcvt.s32.f32 %v472
        %v537 = vcvt.s32.f32 %v473
        %v538 = vcvt.s32.f32 %v474
        %v539 = vcvt.s32.f32 %v475
        %v540 = vcvt.s32.f32 %v476
        %v541 = vcvt.s32.f32 %v477
        %v542 = vcvt.s32.f32 %v478
        %v543 = vcvt.s32.f32 %v479
        %v544 = vcvt.s32.f32 %v480
        %v545 = vcvt.s32.f32 %v481
        %v546 = vcvt.s32.f32 %v482
        %v547 = vcvt.s32.f32 %v483
        %v548 = vcvt.s32.f32 %v484
        %v549 = vcvt.s32.f32 %v485
        %v550 = vcvt.s32.f32 %v486
        %v551 = vcvt.s32.f32 %v487
        %v552 = vcvt.s32.f32 %v488
        %v553 = vcvt.s32.f32 %v489
        %v554 = vcvt.s32.f32 %v490
        %v555 = vcvt.s32.f32 %v491
        %v556 = vcvt.s32.f32 %v492
        %v557 = vcvt.s32.f32 %v493
        %v558 = vcvt.s32.f32 %v494
        %v559 = vcvt.s32.f32 %v495
        %v560 = vcvt.s32.f32 %v496
        %v561 = vcvt.s32.f32 %v497
        %v562 = vcvt.s32.f32 %v498
        %v563 = vcvt.s32.f32 %v499
        %v564 = vcvt.s32.f32 %v500
        %v565 = vcvt.s32.f32 %v501
        %v566 = vcvt.s32.f32 %v502
        %v567 = vcvt.s32.f32 %v503
        %v568 = vcvt.s32.f32 %v504
        %v569 = vcvt.s32.f32 %v505
        %v570 = vcvt.s32.f32 %v506
        %v571 = vcvt.s32.f32 %v507
        %v572 = vcvt.s32.f32 %v508
        %v573 = vcvt.s32.f32 %v509
        %v574 = vcvt.s32.f32 %v510
        %v575 = vcvt.s32.f32 %v511
        %v576 = vcvt.s32.f32 %v512
        %v577 = vcvt.s32.f32 %v513
        %v578 = vcvt.s32.f32 %v514
        %v579 = vcvt.s32.f32 %v515
        %v580 = vcvt.s32.f32 %v516
        %v581 = vcvt.s32.f32 %v517
        %v582 = vcvt.s32.f32 %v518
        %v583 = vcvt.s32.f32 %v519
        %v584 = vcvt.s32.f32 %v520
        %v585 = vcvt.s32.f32 %v521
        %v586 = vcvt.s32.f32 %v522
        %v587 = vcvt.s32.f32 %v523
        %v588 = vcvt.s32.f32 %v524
        %v589 = vpack.c.bf16 %v529, %v525
        %v590 = vpack.c.bf16 %v530, %v526
        %v591 = vpack.c.bf16 %v531, %v527
        %v592 = vpack.c.bf16 %v532, %v528
        %v593 = vpack.c.bf16 %v537, %v533
        %v594 = vpack.c.bf16 %v538, %v534
        %v595 = vpack.c.bf16 %v539, %v535
        %v596 = vpack.c.bf16 %v540, %v536
        %v597 = vpack.c.bf16 %v545, %v541
        %v598 = vpack.c.bf16 %v546, %v542
        %v599 = vpack.c.bf16 %v547, %v543
        %v600 = vpack.c.bf16 %v548, %v544
        %v601 = vpack.c.bf16 %v553, %v549
        %v602 = vpack.c.bf16 %v554, %v550
        %v603 = vpack.c.bf16 %v555, %v551
        %v604 = vpack.c.bf16 %v556, %v552
        %v605 = vpack.c.bf16 %v561, %v557
        %v606 = vpack.c.bf16 %v562, %v558
        %v607 = vpack.c.bf16 %v563, %v559
        %v608 = vpack.c.bf16 %v564, %v560
        %v609 = vpack.c.bf16 %v569, %v565
        %v610 = vpack.c.bf16 %v570, %v566
        %v611 = vpack.c.bf16 %v571, %v567
        %v612 = vpack.c.bf16 %v572, %v568
        %v613 = vpack.c.bf16 %v577, %v573
        %v614 = vpack.c.bf16 %v578, %v574
        %v615 = vpack.c.bf16 %v579, %v575
        %v616 = vpack.c.bf16 %v580, %v576
        %v617 = vpack.c.bf16 %v585, %v581
        %v618 = vpack.c.bf16 %v586, %v582
        %v619 = vpack.c.bf16 %v587, %v583
        %v620 = vpack.c.bf16 %v588, %v584
        %v621 = vld [vmem:[#allocation3] sm:$0xf]
        %622 = vmatprep.subr.bf16.mxu0 %v618
        %623 = vmatpush1.bf16.msra.mxu0 %v617
        %624 = vmatprep.subr.bf16.mxu0 %v614
        %625 = vmatpush1.bf16.msra.mxu0 %v613
        %626 = vmatprep.subr.bf16.mxu0 %v610
        %627 = vmatpush1.bf16.msra.mxu0 %v609
        %628 = vmatprep.subr.bf16.mxu0 %v606
        %629 = vmatpush1.bf16.msra.mxu0 %v605
        %630 = vmatprep.subr.bf16.mxu0 %v602
        %631 = vmatpush1.bf16.msra.mxu0 %v601
        %632 = vmatprep.subr.bf16.mxu0 %v598
        %633 = vmatpush1.bf16.msra.mxu0 %v597
        %634 = vmatprep.subr.bf16.mxu0 %v594
        %635 = vmatpush1.bf16.msra.mxu0 %v593
        %636 = vmatprep.subr.bf16.mxu0 %v590
        %637 = vmatpush1.bf16.msra.mxu0 %v589
        %638 = vmatprep.subr.bf16.mxu0 0
        %639 = vmatpush2.bf16.msra.mxu0 0
        %640 = vmatprep.subr.bf16.mxu0 0
        %641 = vmatpush2.bf16.msra.mxu0 0
        %642 = vmatprep.subr.bf16.mxu0 0
        %643 = vmatpush2.bf16.msra.mxu0 0
        %644 = vmatprep.subr.bf16.mxu0 0
        %645 = vmatpush2.bf16.msra.mxu0 0
        %646 = vmatprep.subr.bf16.mxu0 0
        %647 = vmatpush2.bf16.msra.mxu0 0
        %648 = vmatprep.subr.bf16.mxu0 0
        %649 = vmatpush2.bf16.msra.mxu0 0
        %650 = vmatprep.subr.bf16.mxu0 0
        %651 = vmatpush2.bf16.msra.mxu0 0
        %652 = vmatprep.subr.bf16.mxu0 0
        %653 = vmatpush2.bf16.msra.mxu0 0
        %654 = vmatprep.mubr.bf16.mxu0 0
        %655 = vmatmul.mubr.bf16.gmra.mxu0 %v621
        %v656 = vpop.f32.mrf.mxu0
        %v657 = vadd.f32 0.0, %v656
        %v658 = vpop.f32.mrf.mxu0
        %v659 = vadd.f32 0.0, %v658
        %v660 = vpop.f32.mrf.mxu0
        %v661 = vpop.f32.mrf.mxu0
        %662 = vdwg.mxu0
        %663 = vmatprep.subr.bf16.mxu0 %v620
        %664 = vmatpush1.bf16.msra.mxu0 %v619
        %665 = vmatprep.subr.bf16.mxu0 %v616
        %666 = vmatpush1.bf16.msra.mxu0 %v615
        %667 = vmatprep.subr.bf16.mxu0 %v612
        %668 = vmatpush1.bf16.msra.mxu0 %v611
        %669 = vmatprep.subr.bf16.mxu0 %v608
        %670 = vmatpush1.bf16.msra.mxu0 %v607
        %671 = vmatprep.subr.bf16.mxu0 %v604
        %672 = vmatpush1.bf16.msra.mxu0 %v603
        %673 = vmatprep.subr.bf16.mxu0 %v600
        %674 = vmatpush1.bf16.msra.mxu0 %v599
        %675 = vmatprep.subr.bf16.mxu0 %v596
        %676 = vmatpush1.bf16.msra.mxu0 %v595
        %677 = vmatprep.subr.bf16.mxu0 %v592
        %678 = vmatpush1.bf16.msra.mxu0 %v591
        %679 = vmatprep.subr.bf16.mxu0 0
        %680 = vmatpush2.bf16.msra.mxu0 0
        %681 = vmatprep.subr.bf16.mxu0 0
        %682 = vmatpush2.bf16.msra.mxu0 0
        %683 = vmatprep.subr.bf16.mxu0 0
        %684 = vmatpush2.bf16.msra.mxu0 0
        %685 = vmatprep.subr.bf16.mxu0 0
        %686 = vmatpush2.bf16.msra.mxu0 0
        %687 = vmatprep.subr.bf16.mxu0 0
        %688 = vmatpush2.bf16.msra.mxu0 0
        %689 = vmatprep.subr.bf16.mxu0 0
        %690 = vmatpush2.bf16.msra.mxu0 0
        %691 = vmatprep.subr.bf16.mxu0 0
        %692 = vmatpush2.bf16.msra.mxu0 0
        %693 = vmatprep.subr.bf16.mxu0 0
        %694 = vmatpush2.bf16.msra.mxu0 0
        %695 = vmatprep.mubr.bf16.mxu0 0
        %696 = vmatmul.mubr.bf16.gmra.mxu0 %v621
        %v697 = vpop.f32.mrf.mxu0
        %v698 = vadd.f32 0.0, %v697
        %v699 = vpop.f32.mrf.mxu0
        %v700 = vadd.f32 0.0, %v699
        %v701 = vpop.f32.mrf.mxu0
        %v702 = vpop.f32.mrf.mxu0
        %703 = vdwg.mxu0
        %v704 = vld [vmem:[#allocation2] sm:$0xff]
        %705 = vmatprep.subr.mxu0 0.0
        %706 = vmatpush1.msra.mxu0 %v289
        %707 = vmatprep.subr.mxu0 0.0
        %708 = vmatpush1.msra.mxu0 %v288
        %709 = vmatprep.subr.mxu0 0.0
        %710 = vmatpush1.msra.mxu0 %v287
        %711 = vmatprep.subr.mxu0 0.0
        %712 = vmatpush1.msra.mxu0 %v286
        %713 = vmatprep.subr.mxu0 0.0
        %714 = vmatpush1.msra.mxu0 %v285
        %715 = vmatprep.subr.mxu0 0.0
        %716 = vmatpush1.msra.mxu0 %v284
        %717 = vmatprep.subr.mxu0 0.0
        %718 = vmatpush1.msra.mxu0 %v283
        %719 = vmatprep.subr.mxu0 0.0
        %720 = vmatpush1.msra.mxu0 %v282
        %721 = vmatprep.subr.mxu0 0.0
        %722 = vmatpush1.msra.mxu0 %v281
        %723 = vmatprep.subr.mxu0 0.0
        %724 = vmatpush1.msra.mxu0 %v280
        %725 = vmatprep.subr.mxu0 0.0
        %726 = vmatpush1.msra.mxu0 %v279
        %727 = vmatprep.subr.mxu0 0.0
        %728 = vmatpush1.msra.mxu0 %v278
        %729 = vmatprep.subr.mxu0 0.0
        %730 = vmatpush1.msra.mxu0 %v277
        %731 = vmatprep.subr.mxu0 0.0
        %732 = vmatpush1.msra.mxu0 %v276
        %733 = vmatprep.subr.mxu0 0.0
        %734 = vmatpush1.msra.mxu0 %v275
        %735 = vmatprep.subr.mxu0 0.0
        %736 = vmatpush1.msra.mxu0 %v274
        %737 = vmatprep.subr.mxu0 0.0
        %738 = vmatpush2.msra.mxu0 %v305
        %739 = vmatprep.subr.mxu0 0.0
        %740 = vmatpush2.msra.mxu0 %v304
        %741 = vmatprep.subr.mxu0 0.0
        %742 = vmatpush2.msra.mxu0 %v303
        %743 = vmatprep.subr.mxu0 0.0
        %744 = vmatpush2.msra.mxu0 %v302
        %745 = vmatprep.subr.mxu0 0.0
        %746 = vmatpush2.msra.mxu0 %v301
        %747 = vmatprep.subr.mxu0 0.0
        %748 = vmatpush2.msra.mxu0 %v300
        %749 = vmatprep.subr.mxu0 0.0
        %750 = vmatpush2.msra.mxu0 %v299
        %751 = vmatprep.subr.mxu0 0.0
        %752 = vmatpush2.msra.mxu0 %v298
        %753 = vmatprep.subr.mxu0 0.0
        %754 = vmatpush2.msra.mxu0 %v297
        %755 = vmatprep.subr.mxu0 0.0
        %756 = vmatpush2.msra.mxu0 %v296
        %757 = vmatprep.subr.mxu0 0.0
        %758 = vmatpush2.msra.mxu0 %v295
        %759 = vmatprep.subr.mxu0 0.0
        %760 = vmatpush2.msra.mxu0 %v294
        %761 = vmatprep.subr.mxu0 0.0
        %762 = vmatpush2.msra.mxu0 %v293
        %763 = vmatprep.subr.mxu0 0.0
        %764 = vmatpush2.msra.mxu0 %v292
        %765 = vmatprep.subr.mxu0 0.0
        %766 = vmatpush2.msra.mxu0 %v291
        %767 = vmatprep.subr.mxu0 0.0
        %768 = vmatpush2.msra.mxu0 %v290
        %769 = vmatprep.mubr.f32.mxu0 %v659
        %770 = vmatmul.mubr.f32.gmra.mxu0 %v657
        %v771 = vpop.f32.mrf.mxu0
        %v772 = vadd.f32 0.0, %v771
        %v773 = vpop.f32.mrf.mxu0
        %774 = vdwg.mxu0
        %775 = vmatprep.subr.mxu0 0.0
        %776 = vmatpush1.msra.mxu0 %v321
        %777 = vmatprep.subr.mxu0 0.0
        %778 = vmatpush1.msra.mxu0 %v320
        %779 = vmatprep.subr.mxu0 0.0
        %780 = vmatpush1.msra.mxu0 %v319
        %781 = vmatprep.subr.mxu0 0.0
        %782 = vmatpush1.msra.mxu0 %v318
        %783 = vmatprep.subr.mxu0 0.0
        %784 = vmatpush1.msra.mxu0 %v317
        %785 = vmatprep.subr.mxu0 0.0
        %786 = vmatpush1.msra.mxu0 %v316
        %787 = vmatprep.subr.mxu0 0.0
        %788 = vmatpush1.msra.mxu0 %v315
        %789 = vmatprep.subr.mxu0 0.0
        %790 = vmatpush1.msra.mxu0 %v314
        %791 = vmatprep.subr.mxu0 0.0
        %792 = vmatpush1.msra.mxu0 %v313
        %793 = vmatprep.subr.mxu0 0.0
        %794 = vmatpush1.msra.mxu0 %v312
        %795 = vmatprep.subr.mxu0 0.0
        %796 = vmatpush1.msra.mxu0 %v311
        %797 = vmatprep.subr.mxu0 0.0
        %798 = vmatpush1.msra.mxu0 %v310
        %799 = vmatprep.subr.mxu0 0.0
        %800 = vmatpush1.msra.mxu0 %v309
        %801 = vmatprep.subr.mxu0 0.0
        %802 = vmatpush1.msra.mxu0 %v308
        %803 = vmatprep.subr.mxu0 0.0
        %804 = vmatpush1.msra.mxu0 %v307
        %805 = vmatprep.subr.mxu0 0.0
        %806 = vmatpush1.msra.mxu0 %v306
        %807 = vmatprep.subr.mxu0 0.0
        %808 = vmatpush2.msra.mxu0 %v337
        %809 = vmatprep.subr.mxu0 0.0
        %810 = vmatpush2.msra.mxu0 %v336
        %811 = vmatprep.subr.mxu0 0.0
        %812 = vmatpush2.msra.mxu0 %v335
        %813 = vmatprep.subr.mxu0 0.0
        %814 = vmatpush2.msra.mxu0 %v334
        %815 = vmatprep.subr.mxu0 0.0
        %816 = vmatpush2.msra.mxu0 %v333
        %817 = vmatprep.subr.mxu0 0.0
        %818 = vmatpush2.msra.mxu0 %v332
        %819 = vmatprep.subr.mxu0 0.0
        %820 = vmatpush2.msra.mxu0 %v331
        %821 = vmatprep.subr.mxu0 0.0
        %822 = vmatpush2.msra.mxu0 %v330
        %823 = vmatprep.subr.mxu0 0.0
        %824 = vmatpush2.msra.mxu0 %v329
        %825 = vmatprep.subr.mxu0 0.0
        %826 = vmatpush2.msra.mxu0 %v328
        %827 = vmatprep.subr.mxu0 0.0
        %828 = vmatpush2.msra.mxu0 %v327
        %829 = vmatprep.subr.mxu0 0.0
        %830 = vmatpush2.msra.mxu0 %v326
        %831 = vmatprep.subr.mxu0 0.0
        %832 = vmatpush2.msra.mxu0 %v325
        %833 = vmatprep.subr.mxu0 0.0
        %834 = vmatpush2.msra.mxu0 %v324
        %835 = vmatprep.subr.mxu0 0.0
        %836 = vmatpush2.msra.mxu0 %v323
        %837 = vmatprep.subr.mxu0 0.0
        %838 = vmatpush2.msra.mxu0 %v322
        %839 = vmatprep.mubr.f32.mxu0 %v700
        %840 = vmatmul.mubr.f32.gmra.mxu0 %v698
        %v841 = vpop.f32.mrf.mxu0
        %v842 = vadd.f32 %v772, %v841
        %v843 = vpop.f32.mrf.mxu0
        %844 = vdwg.mxu0
        %v845 = vadd.f32 %v704, %v842
        %846 = vst [vmem:[#allocation2] sm:$0xff] %v845
        // Predicated region
        $region41: #{merged_embbag_cat_forward.1} parent=31 // pred_check
          %p847 = pneg %p241
        $region42: #{merged_embbag_cat_forward.1} parent=31 // pred_check_branch
          %849 = sbr.rel (%p847) target = $region44
        $region43: #{merged_embbag_cat_forward.1} parent=31 // pred_region
          %v850 = vld [vmem:[#allocation2] sm:$0xff]
          %851 = vst [vmem:[%s239] sm:$0xff] %v850
        $region44: #{merged_embbag_cat_forward.1} parent=31 // pred_fallthru
          _
        %p852 = scmp.lt.s32.totalorder %s21, 3
        %s853 = scalar_select %p852, %s21, 3
        %s854 = smul.addr %s853, 8
        %s855 = scalar_lea.vmem %s3, %s854
        // Predicated region
        $region45: #{merged_embbag_cat_forward.1} parent=31 // pred_check
          %p856 = pneg %p127
        $region46: #{merged_embbag_cat_forward.1} parent=31 // pred_check_branch
          %858 = sbr.rel (%p856) target = $region48
        $region47: #{merged_embbag_cat_forward.1} parent=31 // pred_region
          _
        $region48: #{merged_embbag_cat_forward.1} parent=31 // pred_fallthru
          _
      $region32: #{merged_embbag_cat_forward.1} parent=5 // pred_fallthru
        _
      %p859 = scmp.le.s32.totalorder 2, %s12
      // Predicated region
      $region49: #{merged_embbag_cat_forward.1} parent=5 // pred_check
        %p860 = pneg %p859
      $region50: #{merged_embbag_cat_forward.1} parent=5 // pred_check_branch
        %862 = sbr.rel (%p860) target = $region52
      $region51: #{merged_embbag_cat_forward.1} parent=5 // pred_region
        %s863 = ssub.s32 %s12, 2
        // Predicated region
        $region53: #{merged_embbag_cat_forward.1} parent=51 // pred_check
          %p864 = pneg %p133
        $region54: #{merged_embbag_cat_forward.1} parent=51 // pred_check_branch
          %866 = sbr.rel (%p864) target = $region56
        $region55: #{merged_embbag_cat_forward.1} parent=51 // pred_region
          %p867 = scmp.lt.s32.totalorder %s23, 3
          %s868 = scalar_select %p867, %s23, 3
          %s869 = smul.addr %s868, 8
          %s870 = scalar_lea.vmem %s3, %s869
        $region56: #{merged_embbag_cat_forward.1} parent=51 // pred_fallthru
          _
      $region52: #{merged_embbag_cat_forward.1} parent=5 // pred_fallthru
        _
    $region6: #{merged_embbag_cat_forward.1} parent=1 // loop_footer
      %s16 = sadd.s32 1, %s12
    $region7: #{merged_embbag_cat_forward.1} parent=1 // loop_footer_branch
      %11 = sbr.rel target = $region3
    $region8: #{merged_embbag_cat_forward.1} parent=1 // loop_exit
      _
    %871 = vsyncpa [#allocation5], 1
    %s872 = scalar_lea.sflag [#allocation5], 1
    %873 = vsyncpa %s872, 1

</llo_original>
